<compile_context>
chip_gen: v7x
topology: tpu7x:2x2x1
jax: 0.10.0
libtpu: 0.0.40
codegen_flags: <defaults>
</compile_context>

<pallas_src>
import functools
import math

import jax
import jax.numpy as jnp
from jax.experimental import pallas as pl
from jax.experimental.pallas import tpu as pltpu


# ------------------------------- kernels -----------------------------------


def _rmsnorm_kernel(x_ref, w_ref, o_ref, *, eps: float, inv_d: float):
    # x_ref: (TM, Dp) token tile; w_ref: (1, Dp) resident gain; o_ref: (TM, Dp).
    x = x_ref[...].astype(jnp.float32)
    # Mean of squares over the *real* feature width (Dp may be lane-padded with
    # zeros, which do not change the sum of squares).
    ms = jnp.sum(x * x, axis=-1, keepdims=True) * inv_d
    inv = jax.lax.rsqrt(ms + eps)                    # EUP op, off the VALU slot
    w = w_ref[...].astype(jnp.float32)               # (1, Dp) broadcast
    o_ref[...] = (x * inv * w).astype(o_ref.dtype)


def _rmsnorm_residual_kernel(x_ref, r_ref, w_ref, o_ref, *, eps: float, inv_d: float):
    # Fused residual add: one HBM pass for the (add + norm) pair.
    x = x_ref[...].astype(jnp.float32) + r_ref[...].astype(jnp.float32)
    ms = jnp.sum(x * x, axis=-1, keepdims=True) * inv_d
    inv = jax.lax.rsqrt(ms + eps)
    w = w_ref[...].astype(jnp.float32)
    o_ref[...] = (x * inv * w).astype(o_ref.dtype)


# ------------------------------- helpers -----------------------------------


def _vmem_capacity_bytes() -> int:
    """Physical VMEM per TensorCore; conservative 64 MiB (v7x) fallback."""
    try:
        info = pltpu.get_tpu_info()
        for name in ("vmem_capacity_bytes", "vmem_bytes", "vmem_size_bytes"):
            val = getattr(info, name, None)
            if val:
                return int(val)
    except Exception:
        pass
    return 64 * 1024 * 1024


def _token_axis_semantics():
    """CORE_PARALLEL on v7x (2 TCs share the HBM); plain 'parallel' elsewhere."""
    try:
        kind = jax.devices()[0].device_kind.lower()
    except Exception:
        kind = ""
    if "v7" in kind and hasattr(pltpu, "CORE_PARALLEL"):
        return (pltpu.CORE_PARALLEL,)
    return ("parallel",)


def _choose_block_tokens(m, d_padded, itemsize, max_block_tokens=None):
    """Token-tile rows targeting ~4 MiB activation blocks, VMEM-budget capped."""
    sublane = 8 * max(1, 4 // itemsize)             # 8 for f32, 16 for bf16
    target_block_bytes = 4 * 1024 * 1024            # 2-8 MiB sweet spot (mem-bound)
    # Live VMEM per token row: 2x double-buffered input blocks + 2x output
    # blocks in the I/O dtype plus ~2 full-block f32 temporaries in-kernel.
    per_row_live = d_padded * (4 * itemsize + 8)
    budget = int(0.45 * _vmem_capacity_bytes())     # headroom for compiler internals
    tm = target_block_bytes // max(1, d_padded * itemsize)
    tm = min(tm, max(1, budget // per_row_live))
    if max_block_tokens is not None:
        tm = min(tm, max_block_tokens)
    tm = max(sublane, (tm // sublane) * sublane)
    if tm >= m:
        return m                                    # full-extent block is always legal
    return tm


# ------------------------------- wrapper -----------------------------------


def rms_norm(x, weight, eps: float = 1e-5, residual=None, max_block_tokens=None):
    """RMSNorm over the last dim of `x` with per-feature gain `weight`.

    x: (..., D); weight: (D,); optional `residual` with x's shape is fused as
    (x + residual) before the norm.  Returns same shape/dtype as x.
    """
    orig_shape = x.shape
    d = orig_shape[-1]
    m = math.prod(orig_shape[:-1]) if len(orig_shape) > 1 else 1

    x2d = x.reshape(m, d)
    w2d = weight.reshape(1, d)
    r2d = residual.reshape(m, d) if residual is not None else None

    # Lane-density guard: pad the feature axis to a multiple of 128 so stores
    # are unmasked.  Real model widths (multiples of 128) skip this path.
    d_padded = d if d % 128 == 0 else ((d + 127) // 128) * 128
    if d_padded != d:
        pad = ((0, 0), (0, d_padded - d))
        x2d = jnp.pad(x2d, pad)
        w2d = jnp.pad(w2d, pad)
        if r2d is not None:
            r2d = jnp.pad(r2d, pad)

    itemsize = jnp.dtype(x.dtype).itemsize
    tm = _choose_block_tokens(m, d_padded, itemsize, max_block_tokens)
    grid = (pl.cdiv(m, tm),)

    if r2d is None:
        kernel = functools.partial(_rmsnorm_kernel, eps=eps, inv_d=1.0 / d)
        act_operands = (x2d,)
    else:
        kernel = functools.partial(_rmsnorm_residual_kernel, eps=eps, inv_d=1.0 / d)
        act_operands = (x2d, r2d)

    vmem_cap = _vmem_capacity_bytes()
    vmem_limit = int(max(32 * 1024 * 1024, min(0.75 * vmem_cap, 100 * 1024 * 1024)))

    act_spec = pl.BlockSpec((tm, d_padded), lambda i: (i, 0))
    out_shape = jax.ShapeDtypeStruct((m, d_padded), x.dtype)

    def build_and_call(semantics, single_buffer_weight):
        if single_buffer_weight:
            w_spec = pl.BlockSpec((1, d_padded), lambda i: (0, 0),
                                  pipeline_mode=pl.Buffered(1))
        else:
            w_spec = pl.BlockSpec((1, d_padded), lambda i: (0, 0))
        return pl.pallas_call(
            kernel,
            out_shape=out_shape,
            grid_spec=pltpu.PrefetchScalarGridSpec(
                num_scalar_prefetch=0,
                grid=grid,
                in_specs=[act_spec] * len(act_operands) + [w_spec],
                out_specs=act_spec,
            ),
            compiler_params=pltpu.CompilerParams(
                dimension_semantics=semantics,
                vmem_limit_bytes=vmem_limit,
            ),
        )(*act_operands, w2d)

    # Primary: generation-aware semantics + single-buffered gain.  Fall back to
    # the plain configuration if either feature is rejected by this JAX/Mosaic
    # build (keeps the kernel runnable on every TPU generation).
    attempts = [
        (_token_axis_semantics(), True),
        (("parallel",), False),
        (("arbitrary",), False),
    ]
    out2d = None
    last_err = None
    for semantics, single_buf in attempts:
        try:
            out2d = build_and_call(semantics, single_buf)
            break
        except Exception as err:  # config-dependent fallback
            last_err = err
    if out2d is None:
        raise last_err

    if d_padded != d:
        out2d = out2d[:, :d]
    return out2d.reshape(orig_shape)


# --------------------------------- demo ------------------------------------


if __name__ == "__main__":
    key = jax.random.PRNGKey(0)
    k_x, k_w, k_r, k_y = jax.random.split(key, 4)

    def ref_rmsnorm(x, w, eps):
        xf = x.astype(jnp.float32)
        inv = jax.lax.rsqrt(jnp.mean(xf * xf, axis=-1, keepdims=True) + eps)
        return (xf * inv * w.astype(jnp.float32)).astype(x.dtype)

    eps = 1e-5

    # 1) Module-spec demo shape: (B, S, D) = (2, 8, 32).  D=32 exercises the
    #    lane-padding path; weight perturbed from ones so the gain matters.
    B, S, D = 2, 8, 32
    x = jax.random.normal(k_x, (B, S, D), dtype=jnp.float32)
    w = jnp.ones((D,), jnp.float32) + 0.1 * jax.random.normal(k_w, (D,), jnp.float32)
    out = jax.block_until_ready(rms_norm(x, w, eps=eps))
    assert out.shape == x.shape and out.dtype == x.dtype
    assert jnp.allclose(out, ref_rmsnorm(x, w, eps), atol=1e-5, rtol=1e-5)

    # 2) Lane-dense D, non-divisible token count (M=15), forced partial tile.
    x2 = jax.random.normal(k_y, (3, 5, 256), dtype=jnp.float32)
    w2 = jnp.ones((256,), jnp.float32) + 0.1 * jax.random.normal(k_w, (256,), jnp.float32)
    out2 = jax.block_until_ready(rms_norm(x2, w2, eps=eps, max_block_tokens=8))
    assert jnp.allclose(out2, ref_rmsnorm(x2, w2, eps), atol=1e-5, rtol=1e-5)

    # 3) bf16 I/O with f32 accumulation (compare vs an f32-accumulated ref).
    x3 = jax.random.normal(k_x, (2, 8, 256), dtype=jnp.float32).astype(jnp.bfloat16)
    w3 = w2.astype(jnp.bfloat16)
    out3 = jax.block_until_ready(rms_norm(x3, w3, eps=eps))
    assert out3.dtype == jnp.bfloat16
    assert jnp.allclose(out3.astype(jnp.float32),
                        ref_rmsnorm(x3, w3, eps).astype(jnp.float32),
                        atol=2e-2, rtol=2e-2)

    # 4) Fused residual add (single HBM pass instead of separate add + norm).
    r4 = jax.random.normal(k_r, (2, 8, 256), dtype=jnp.float32)
    x4 = jax.random.normal(k_y, (2, 8, 256), dtype=jnp.float32)
    out4 = jax.block_until_ready(rms_norm(x4, w2, eps=eps, residual=r4))
    assert jnp.allclose(out4, ref_rmsnorm(x4 + r4, w2, eps), atol=1e-5, rtol=1e-5)

    print("KERNEL_OK")
</pallas_src>

<mosaic_0001>
module attributes {stable_mosaic.version = 11 : i64} {
  func.func @_rmsnorm_kernel(%arg0: i32, %arg1: memref<16x128xf32, #tpu.memory_space<vmem>>, %arg2: memref<1x128xf32, #tpu.memory_space<vmem>>, %arg3: memref<16x128xf32, #tpu.memory_space<vmem>>) attributes {dimension_semantics = [#tpu.dimension_semantics<parallel>], iteration_bounds = array<i64: 1>, scalar_prefetch = 0 : i64, scratch_operands = 0 : i64, tpu.core_type = #tpu.core_type<tc>, window_params = [{transform_indices = @transform_0, window_bounds = array<i64: 16, 128>}, {pipeline_mode = #tpu.pipeline_mode<synchronous>, transform_indices = @transform_1, window_bounds = array<i64: 1, 128>}, {transform_indices = @transform_2, window_bounds = array<i64: 16, 128>}]} {
    %c0 = arith.constant 0 : index
    %c0_0 = arith.constant 0 : index
    %0 = vector.load %arg1[%c0, %c0_0] : memref<16x128xf32, #tpu.memory_space<vmem>>, vector<16x128xf32>
    %1 = arith.mulf %0, %0 : vector<16x128xf32>
    %cst = arith.constant dense<0.000000e+00> : vector<16xf32>
    %2 = vector.multi_reduction <add>, %1, %cst [1] : vector<16x128xf32> to vector<16xf32>
    %3 = vector.shape_cast %2 : vector<16xf32> to vector<16x1xf32>
    %cst_1 = arith.constant 3.125000e-02 : f32
    %4 = vector.broadcast %cst_1 : f32 to vector<16x1xf32>
    %5 = arith.mulf %3, %4 : vector<16x1xf32>
    %cst_2 = arith.constant 9.99999974E-6 : f32
    %6 = vector.broadcast %cst_2 : f32 to vector<16x1xf32>
    %7 = arith.addf %5, %6 : vector<16x1xf32>
    %8 = math.rsqrt %7 : vector<16x1xf32>
    %c0_3 = arith.constant 0 : index
    %c0_4 = arith.constant 0 : index
    %9 = vector.load %arg2[%c0_3, %c0_4] : memref<1x128xf32, #tpu.memory_space<vmem>>, vector<1x128xf32>
    %10 = vector.broadcast %8 : vector<16x1xf32> to vector<16x128xf32>
    %11 = arith.mulf %0, %10 : vector<16x128xf32>
    %12 = vector.broadcast %9 : vector<1x128xf32> to vector<16x128xf32>
    %13 = arith.mulf %11, %12 : vector<16x128xf32>
    %c0_5 = arith.constant 0 : index
    %c0_6 = arith.constant 0 : index
    %14 = vector.load %arg3[%c0_5, %c0_6] : memref<16x128xf32, #tpu.memory_space<vmem>>, vector<16x128xf32>
    tpu.vector_store %arg3[%c0_5, %c0_6], %13 {strides = array<i32>} : memref<16x128xf32, #tpu.memory_space<vmem>>, vector<16x128xf32>,
    return
  }
  func.func @transform_0(%arg0: i32) -> (i32, i32) {
    %c0_i32 = arith.constant 0 : i32
    %c0_i32_0 = arith.constant 0 : i32
    return %arg0, %c0_i32 : i32, i32
  }
  func.func @transform_1(%arg0: i32) -> (i32, i32) {
    %c0_i32 = arith.constant 0 : i32
    %c0_i32_0 = arith.constant 0 : i32
    %c0_i32_1 = arith.constant 0 : i32
    return %c0_i32, %c0_i32_0 : i32, i32
  }
  func.func @transform_2(%arg0: i32) -> (i32, i32) {
    %c0_i32 = arith.constant 0 : i32
    %c0_i32_0 = arith.constant 0 : i32
    return %arg0, %c0_i32 : i32, i32
  }
}

module attributes {stable_mosaic.version = 11 : i64} {
  func.func @_rmsnorm_kernel(%arg0: i32, %arg1: memref<16x128xf32, #tpu.memory_space<vmem>>, %arg2: memref<1x128xf32, #tpu.memory_space<vmem>>, %arg3: memref<16x128xf32, #tpu.memory_space<vmem>>) attributes {dimension_semantics = [#tpu.dimension_semantics<parallel>], iteration_bounds = array<i64: 1>, scalar_prefetch = 0 : i64, scratch_operands = 0 : i64, tpu.core_type = #tpu.core_type<tc>, window_params = [{transform_indices = @transform_0, window_bounds = array<i64: 16, 128>}, {pipeline_mode = #tpu.pipeline_mode<synchronous>, transform_indices = @transform_1, window_bounds = array<i64: 1, 128>}, {transform_indices = @transform_2, window_bounds = array<i64: 16, 128>}]} {
    %c0 = arith.constant 0 : index
    %c0_0 = arith.constant 0 : index
    %0 = vector.load %arg1[%c0, %c0_0] : memref<16x128xf32, #tpu.memory_space<vmem>>, vector<16x128xf32>
    %1 = arith.mulf %0, %0 : vector<16x128xf32>
    %cst = arith.constant dense<0.000000e+00> : vector<16xf32>
    %2 = vector.multi_reduction <add>, %1, %cst [1] : vector<16x128xf32> to vector<16xf32>
    %3 = vector.shape_cast %2 : vector<16xf32> to vector<16x1xf32>
    %cst_1 = arith.constant 3.125000e-02 : f32
    %4 = vector.broadcast %cst_1 : f32 to vector<16x1xf32>
    %5 = arith.mulf %3, %4 : vector<16x1xf32>
    %cst_2 = arith.constant 9.99999974E-6 : f32
    %6 = vector.broadcast %cst_2 : f32 to vector<16x1xf32>
    %7 = arith.addf %5, %6 : vector<16x1xf32>
    %8 = math.rsqrt %7 : vector<16x1xf32>
    %c0_3 = arith.constant 0 : index
    %c0_4 = arith.constant 0 : index
    %9 = vector.load %arg2[%c0_3, %c0_4] : memref<1x128xf32, #tpu.memory_space<vmem>>, vector<1x128xf32>
    %10 = vector.broadcast %8 : vector<16x1xf32> to vector<16x128xf32>
    %11 = arith.mulf %0, %10 : vector<16x128xf32>
    %12 = vector.broadcast %9 : vector<1x128xf32> to vector<16x128xf32>
    %13 = arith.mulf %11, %12 : vector<16x128xf32>
    %c0_5 = arith.constant 0 : index
    %c0_6 = arith.constant 0 : index
    %14 = vector.load %arg3[%c0_5, %c0_6] : memref<16x128xf32, #tpu.memory_space<vmem>>, vector<16x128xf32>
    tpu.vector_store %arg3[%c0_5, %c0_6], %13 {strides = array<i32>} : memref<16x128xf32, #tpu.memory_space<vmem>>, vector<16x128xf32>,
    return
  }
  func.func @transform_0(%arg0: i32) -> (i32, i32) {
    %c0_i32 = arith.constant 0 : i32
    %c0_i32_0 = arith.constant 0 : i32
    return %arg0, %c0_i32 : i32, i32
  }
  func.func @transform_1(%arg0: i32) -> (i32, i32) {
    %c0_i32 = arith.constant 0 : i32
    %c0_i32_0 = arith.constant 0 : i32
    %c0_i32_1 = arith.constant 0 : i32
    return %c0_i32, %c0_i32_0 : i32, i32
  }
  func.func @transform_2(%arg0: i32) -> (i32, i32) {
    %c0_i32 = arith.constant 0 : i32
    %c0_i32_0 = arith.constant 0 : i32
    return %arg0, %c0_i32 : i32, i32
  }
}

module attributes {stable_mosaic.version = 11 : i64} {
  func.func @_rmsnorm_kernel(%arg0: i32, %arg1: memref<16x128xf32, #tpu.memory_space<vmem>>, %arg2: memref<1x128xf32, #tpu.memory_space<vmem>>, %arg3: memref<16x128xf32, #tpu.memory_space<vmem>>) attributes {dimension_semantics = [#tpu.dimension_semantics<arbitrary>], iteration_bounds = array<i64: 1>, scalar_prefetch = 0 : i64, scratch_operands = 0 : i64, tpu.core_type = #tpu.core_type<tc>, window_params = [{transform_indices = @transform_0, window_bounds = array<i64: 16, 128>}, {pipeline_mode = #tpu.pipeline_mode<synchronous>, transform_indices = @transform_1, window_bounds = array<i64: 1, 128>}, {transform_indices = @transform_2, window_bounds = array<i64: 16, 128>}]} {
    %c0 = arith.constant 0 : index
    %c0_0 = arith.constant 0 : index
    %0 = vector.load %arg1[%c0, %c0_0] : memref<16x128xf32, #tpu.memory_space<vmem>>, vector<16x128xf32>
    %1 = arith.mulf %0, %0 : vector<16x128xf32>
    %cst = arith.constant dense<0.000000e+00> : vector<16xf32>
    %2 = vector.multi_reduction <add>, %1, %cst [1] : vector<16x128xf32> to vector<16xf32>
    %3 = vector.shape_cast %2 : vector<16xf32> to vector<16x1xf32>
    %cst_1 = arith.constant 3.125000e-02 : f32
    %4 = vector.broadcast %cst_1 : f32 to vector<16x1xf32>
    %5 = arith.mulf %3, %4 : vector<16x1xf32>
    %cst_2 = arith.constant 9.99999974E-6 : f32
    %6 = vector.broadcast %cst_2 : f32 to vector<16x1xf32>
    %7 = arith.addf %5, %6 : vector<16x1xf32>
    %8 = math.rsqrt %7 : vector<16x1xf32>
    %c0_3 = arith.constant 0 : index
    %c0_4 = arith.constant 0 : index
    %9 = vector.load %arg2[%c0_3, %c0_4] : memref<1x128xf32, #tpu.memory_space<vmem>>, vector<1x128xf32>
    %10 = vector.broadcast %8 : vector<16x1xf32> to vector<16x128xf32>
    %11 = arith.mulf %0, %10 : vector<16x128xf32>
    %12 = vector.broadcast %9 : vector<1x128xf32> to vector<16x128xf32>
    %13 = arith.mulf %11, %12 : vector<16x128xf32>
    %c0_5 = arith.constant 0 : index
    %c0_6 = arith.constant 0 : index
    %14 = vector.load %arg3[%c0_5, %c0_6] : memref<16x128xf32, #tpu.memory_space<vmem>>, vector<16x128xf32>
    tpu.vector_store %arg3[%c0_5, %c0_6], %13 {strides = array<i32>} : memref<16x128xf32, #tpu.memory_space<vmem>>, vector<16x128xf32>,
    return
  }
  func.func @transform_0(%arg0: i32) -> (i32, i32) {
    %c0_i32 = arith.constant 0 : i32
    %c0_i32_0 = arith.constant 0 : i32
    return %arg0, %c0_i32 : i32, i32
  }
  func.func @transform_1(%arg0: i32) -> (i32, i32) {
    %c0_i32 = arith.constant 0 : i32
    %c0_i32_0 = arith.constant 0 : i32
    %c0_i32_1 = arith.constant 0 : i32
    return %c0_i32, %c0_i32_0 : i32, i32
  }
  func.func @transform_2(%arg0: i32) -> (i32, i32) {
    %c0_i32 = arith.constant 0 : i32
    %c0_i32_0 = arith.constant 0 : i32
    return %arg0, %c0_i32 : i32, i32
  }
}

</mosaic_0001>

<llo_original>
// kernel: tpu_custom_call.1
$region0: #{tpu_custom_call.1}
  #allocation0 [shape = 'u32[]', space=smem, size = 0x4, offset = 0x4, fixed_abs, tag = 'smem constant byte address 0x4 - core index']
  #allocation1 [shape = 'u32[144,128]{1,0:T(1,128)}', space=vmem, size = 0x12000, scoped, tag = 'internal scratch']
  %s0 = inlined_call_operand.hbm [shape: f32[16,128], index: 0, kind: input, shape index: {}]
  %s1 = inlined_call_operand.vmem [shape: f32[1,128], index: 1, kind: input, shape index: {}]
  %s2 = inlined_call_operand.hbm [shape: f32[16,128], index: 2, kind: output, shape index: {}]
  %s3 = sld [smem:[#allocation0]]
  $region22: #{tpu_custom_call.1} parent=0
    _
  %s5 = ssub.s32 1, %s3
  %s6 = scalar_select 0, %s5, %s3
  $region1: #{tpu_custom_call.1} parent=0
    #allocation2 [shape = 'u8[8192]{0}', space=vmem, size = 0x2000, scoped, tag = 'input window, operand 0, single buffered']
    #allocation3 [shape = 's32[1]{0}', space=sflag, size = 0x4, scoped, tag = 'scoped memory for tpu_custom_call.1']
    #allocation4 [shape = 's32[1]{0}', space=sflag, size = 0x4, scoped, tag = 'scoped memory for tpu_custom_call.1']
    #allocation5 [shape = 'u8[8192]{0}', space=vmem, size = 0x2000, scoped, tag = 'output window, operand 0, single buffered']
    %7 = vsyncpa [#allocation3], 0
    %8 = vsyncpa [#allocation4], 0
    // Predicated region
    $region2: #{tpu_custom_call.1} parent=1 // pred_check
      _
    $region3: #{tpu_custom_call.1} parent=1 // pred_check_branch
      %10 = sbr.rel (0) target = $region5
    $region4: #{tpu_custom_call.1} parent=1 // pred_region
      %s12 = ssub.s32 256, 256
      %13 = vsyncadd [#allocation3], %s12
      %s14 = sshll.u32 [#allocation2], 4
      %s15 = int_to_ptr.vmem [resolvable:$true] %s14
      %20 = dma.hbm_to_vmem [thread:$0]  %s0, 256, %s15, [#allocation3], 128, 128, 8
    $region5: #{tpu_custom_call.1} parent=1 // pred_fallthru
      _
    // Predicated region
    $region6: #{tpu_custom_call.1} parent=1 // pred_check
      _
    $region7: #{tpu_custom_call.1} parent=1 // pred_check_branch
      %22 = sbr.rel (0) target = $region9
    $region8: #{tpu_custom_call.1} parent=1 // pred_region
      _
    $region9: #{tpu_custom_call.1} parent=1 // pred_fallthru
      _
    // Predicated region
    $region10: #{tpu_custom_call.1} parent=1 // pred_check
      _
    $region11: #{tpu_custom_call.1} parent=1 // pred_check_branch
      %24 = sbr.rel (0) target = $region13
    $region12: #{tpu_custom_call.1} parent=1 // pred_region
      %25 = dma.done [#allocation3], 256
    $region13: #{tpu_custom_call.1} parent=1 // pred_fallthru
      _
    %v26 = vld [vmem:[#allocation2] sm:$0xff]
    %v27 = vld [vmem:[#allocation2 + $0x8] sm:$0xff]
    %v28 = vmul.f32 %v26, %v26
    %v29 = vmul.f32 %v27, %v27
    %30 = vadd.xlane.f32.xlu0 %v28
    %v31 = vpop.xlane.xlu0 %30
    %32 = vadd.xlane.f32.xlu0 %v29
    %v33 = vpop.xlane.xlu0 %32
    %v34 = vmul.f32 %v31, 0.03125
    %v35 = vmul.f32 %v33, 0.03125
    %v36 = vadd.f32 %v34, 1e-05
    %v37 = vadd.f32 %v35, 1e-05
    %v38 = vrsqrt.pop %v36
    %v39 = vrsqrt.pop %v37
    %v40 = vld [vmem:[%s1] sm:$0x1]
    %v41 = vmul.f32 %v26, %v38
    %v42 = vmul.f32 %v27, %v39
    %v44 = vlaneseq
    %v45 = vshrl.u32 %v44, 7
    %v46 = vsub.s32 0, %v45
    %v47 = vrot.slane %v40, %v46
    %v49 = vmul.f32 %v41, %v47
    %v50 = vmul.f32 %v42, %v47
    %51 = vst [vmem:[#allocation5] sm:$0xff] %v49
    %52 = vst [vmem:[#allocation5 + $0x8] sm:$0xff] %v50
    // Predicated region
    $region14: #{tpu_custom_call.1} parent=1 // pred_check
      _
    $region15: #{tpu_custom_call.1} parent=1 // pred_check_branch
      %54 = sbr.rel (0) target = $region17
    $region16: #{tpu_custom_call.1} parent=1 // pred_region
      %s56 = ssub.s32 256, 256
      %57 = vsyncadd [#allocation4], %s56
      %s58 = sshll.u32 [#allocation5], 4
      %s59 = int_to_ptr.vmem [resolvable:$true] %s58
      %64 = dma.vmem_to_hbm [thread:$0]  %s59, 256, %s2, [#allocation4], 128, 128, 8
    $region17: #{tpu_custom_call.1} parent=1 // pred_fallthru
      _
    // Predicated region
    $region18: #{tpu_custom_call.1} parent=1 // pred_check
      _
    $region19: #{tpu_custom_call.1} parent=1 // pred_check_branch
      %66 = sbr.rel (0) target = $region21
    $region20: #{tpu_custom_call.1} parent=1 // pred_region
      %67 = dma.done [#allocation4], 256
    $region21: #{tpu_custom_call.1} parent=1 // pred_fallthru
      _
    %68 = vsyncpa [#allocation3], 1
    %69 = vsyncpa [#allocation4], 1

// kernel: tpu_custom_call.1
$region0: #{tpu_custom_call.1}
  #allocation0 [shape = 'u32[]', space=smem, size = 0x4, offset = 0x4, fixed_abs, tag = 'smem constant byte address 0x4 - core index']
  #allocation1 [shape = 'u32[144,128]{1,0:T(1,128)}', space=vmem, size = 0x12000, scoped, tag = 'internal scratch']
  %s0 = inlined_call_operand.hbm [shape: f32[16,128], index: 0, kind: input, shape index: {}]
  %s1 = inlined_call_operand.vmem [shape: f32[1,128], index: 1, kind: input, shape index: {}]
  %s2 = inlined_call_operand.hbm [shape: f32[16,128], index: 2, kind: output, shape index: {}]
  %s3 = sld [smem:[#allocation0]]
  $region22: #{tpu_custom_call.1} parent=0
    _
  %s5 = ssub.s32 1, %s3
  %s6 = scalar_select 0, %s5, %s3
  $region1: #{tpu_custom_call.1} parent=0
    #allocation2 [shape = 'u8[8192]{0}', space=vmem, size = 0x2000, scoped, tag = 'input window, operand 0, single buffered']
    #allocation3 [shape = 's32[1]{0}', space=sflag, size = 0x4, scoped, tag = 'scoped memory for tpu_custom_call.1']
    #allocation4 [shape = 's32[1]{0}', space=sflag, size = 0x4, scoped, tag = 'scoped memory for tpu_custom_call.1']
    #allocation5 [shape = 'u8[8192]{0}', space=vmem, size = 0x2000, scoped, tag = 'output window, operand 0, single buffered']
    %7 = vsyncpa [#allocation3], 0
    %8 = vsyncpa [#allocation4], 0
    // Predicated region
    $region2: #{tpu_custom_call.1} parent=1 // pred_check
      _
    $region3: #{tpu_custom_call.1} parent=1 // pred_check_branch
      %10 = sbr.rel (0) target = $region5
    $region4: #{tpu_custom_call.1} parent=1 // pred_region
      %s12 = ssub.s32 256, 256
      %13 = vsyncadd [#allocation3], %s12
      %s14 = sshll.u32 [#allocation2], 4
      %s15 = int_to_ptr.vmem [resolvable:$true] %s14
      %20 = dma.hbm_to_vmem [thread:$0]  %s0, 256, %s15, [#allocation3], 128, 128, 8
    $region5: #{tpu_custom_call.1} parent=1 // pred_fallthru
      _
    // Predicated region
    $region6: #{tpu_custom_call.1} parent=1 // pred_check
      _
    $region7: #{tpu_custom_call.1} parent=1 // pred_check_branch
      %22 = sbr.rel (0) target = $region9
    $region8: #{tpu_custom_call.1} parent=1 // pred_region
      _
    $region9: #{tpu_custom_call.1} parent=1 // pred_fallthru
      _
    // Predicated region
    $region10: #{tpu_custom_call.1} parent=1 // pred_check
      _
    $region11: #{tpu_custom_call.1} parent=1 // pred_check_branch
      %24 = sbr.rel (0) target = $region13
    $region12: #{tpu_custom_call.1} parent=1 // pred_region
      %25 = dma.done [#allocation3], 256
    $region13: #{tpu_custom_call.1} parent=1 // pred_fallthru
      _
    %v26 = vld [vmem:[#allocation2] sm:$0xff]
    %v27 = vld [vmem:[#allocation2 + $0x8] sm:$0xff]
    %v28 = vmul.f32 %v26, %v26
    %v29 = vmul.f32 %v27, %v27
    %30 = vadd.xlane.f32.xlu0 %v28
    %v31 = vpop.xlane.xlu0 %30
    %32 = vadd.xlane.f32.xlu0 %v29
    %v33 = vpop.xlane.xlu0 %32
    %v34 = vmul.f32 %v31, 0.03125
    %v35 = vmul.f32 %v33, 0.03125
    %v36 = vadd.f32 %v34, 1e-05
    %v37 = vadd.f32 %v35, 1e-05
    %v38 = vrsqrt.pop %v36
    %v39 = vrsqrt.pop %v37
    %v40 = vld [vmem:[%s1] sm:$0x1]
    %v41 = vmul.f32 %v26, %v38
    %v42 = vmul.f32 %v27, %v39
    %v44 = vlaneseq
    %v45 = vshrl.u32 %v44, 7
    %v46 = vsub.s32 0, %v45
    %v47 = vrot.slane %v40, %v46
    %v49 = vmul.f32 %v41, %v47
    %v50 = vmul.f32 %v42, %v47
    %51 = vst [vmem:[#allocation5] sm:$0xff] %v49
    %52 = vst [vmem:[#allocation5 + $0x8] sm:$0xff] %v50
    // Predicated region
    $region14: #{tpu_custom_call.1} parent=1 // pred_check
      _
    $region15: #{tpu_custom_call.1} parent=1 // pred_check_branch
      %54 = sbr.rel (0) target = $region17
    $region16: #{tpu_custom_call.1} parent=1 // pred_region
      %s56 = ssub.s32 256, 256
      %57 = vsyncadd [#allocation4], %s56
      %s58 = sshll.u32 [#allocation5], 4
      %s59 = int_to_ptr.vmem [resolvable:$true] %s58
      %64 = dma.vmem_to_hbm [thread:$0]  %s59, 256, %s2, [#allocation4], 128, 128, 8
    $region17: #{tpu_custom_call.1} parent=1 // pred_fallthru
      _
    // Predicated region
    $region18: #{tpu_custom_call.1} parent=1 // pred_check
      _
    $region19: #{tpu_custom_call.1} parent=1 // pred_check_branch
      %66 = sbr.rel (0) target = $region21
    $region20: #{tpu_custom_call.1} parent=1 // pred_region
      %67 = dma.done [#allocation4], 256
    $region21: #{tpu_custom_call.1} parent=1 // pred_fallthru
      _
    %68 = vsyncpa [#allocation3], 1
    %69 = vsyncpa [#allocation4], 1

// kernel: tpu_custom_call.1
$region0: #{tpu_custom_call.1}
  #allocation0 [shape = 'u32[]', space=smem, size = 0x4, offset = 0x4, fixed_abs, tag = 'smem constant byte address 0x4 - core index']
  #allocation1 [shape = 'u32[144,128]{1,0:T(1,128)}', space=vmem, size = 0x12000, scoped, tag = 'internal scratch']
  %s0 = inlined_call_operand.hbm [shape: f32[16,128], index: 0, kind: input, shape index: {}]
  %s1 = inlined_call_operand.vmem [shape: f32[1,128], index: 1, kind: input, shape index: {}]
  %s2 = inlined_call_operand.hbm [shape: f32[16,128], index: 2, kind: output, shape index: {}]
  %s3 = sld [smem:[#allocation0]]
  $region22: #{tpu_custom_call.1} parent=0
    _
  %s5 = ssub.s32 1, %s3
  %s6 = scalar_select 0, %s5, %s3
  $region1: #{tpu_custom_call.1} parent=0
    #allocation2 [shape = 'u8[8192]{0}', space=vmem, size = 0x2000, scoped, tag = 'input window, operand 0, single buffered']
    #allocation3 [shape = 's32[1]{0}', space=sflag, size = 0x4, scoped, tag = 'scoped memory for tpu_custom_call.1']
    #allocation4 [shape = 's32[1]{0}', space=sflag, size = 0x4, scoped, tag = 'scoped memory for tpu_custom_call.1']
    #allocation5 [shape = 'u8[8192]{0}', space=vmem, size = 0x2000, scoped, tag = 'output window, operand 0, single buffered']
    %7 = vsyncpa [#allocation3], 0
    %8 = vsyncpa [#allocation4], 0
    // Predicated region
    $region2: #{tpu_custom_call.1} parent=1 // pred_check
      _
    $region3: #{tpu_custom_call.1} parent=1 // pred_check_branch
      %10 = sbr.rel (0) target = $region5
    $region4: #{tpu_custom_call.1} parent=1 // pred_region
      %s12 = ssub.s32 256, 256
      %13 = vsyncadd [#allocation3], %s12
      %s14 = sshll.u32 [#allocation2], 4
      %s15 = int_to_ptr.vmem [resolvable:$true] %s14
      %20 = dma.hbm_to_vmem [thread:$0]  %s0, 256, %s15, [#allocation3], 128, 128, 8
    $region5: #{tpu_custom_call.1} parent=1 // pred_fallthru
      _
    // Predicated region
    $region6: #{tpu_custom_call.1} parent=1 // pred_check
      _
    $region7: #{tpu_custom_call.1} parent=1 // pred_check_branch
      %22 = sbr.rel (0) target = $region9
    $region8: #{tpu_custom_call.1} parent=1 // pred_region
      _
    $region9: #{tpu_custom_call.1} parent=1 // pred_fallthru
      _
    // Predicated region
    $region10: #{tpu_custom_call.1} parent=1 // pred_check
      _
    $region11: #{tpu_custom_call.1} parent=1 // pred_check_branch
      %24 = sbr.rel (0) target = $region13
    $region12: #{tpu_custom_call.1} parent=1 // pred_region
      %25 = dma.done [#allocation3], 256
    $region13: #{tpu_custom_call.1} parent=1 // pred_fallthru
      _
    %v26 = vld [vmem:[#allocation2] sm:$0xff]
    %v27 = vld [vmem:[#allocation2 + $0x8] sm:$0xff]
    %v28 = vmul.f32 %v26, %v26
    %v29 = vmul.f32 %v27, %v27
    %30 = vadd.xlane.f32.xlu0 %v28
    %v31 = vpop.xlane.xlu0 %30
    %32 = vadd.xlane.f32.xlu0 %v29
    %v33 = vpop.xlane.xlu0 %32
    %v34 = vmul.f32 %v31, 0.03125
    %v35 = vmul.f32 %v33, 0.03125
    %v36 = vadd.f32 %v34, 1e-05
    %v37 = vadd.f32 %v35, 1e-05
    %v38 = vrsqrt.pop %v36
    %v39 = vrsqrt.pop %v37
    %v40 = vld [vmem:[%s1] sm:$0x1]
    %v41 = vmul.f32 %v26, %v38
    %v42 = vmul.f32 %v27, %v39
    %v44 = vlaneseq
    %v45 = vshrl.u32 %v44, 7
    %v46 = vsub.s32 0, %v45
    %v47 = vrot.slane %v40, %v46
    %v49 = vmul.f32 %v41, %v47
    %v50 = vmul.f32 %v42, %v47
    %51 = vst [vmem:[#allocation5] sm:$0xff] %v49
    %52 = vst [vmem:[#allocation5 + $0x8] sm:$0xff] %v50
    // Predicated region
    $region14: #{tpu_custom_call.1} parent=1 // pred_check
      _
    $region15: #{tpu_custom_call.1} parent=1 // pred_check_branch
      %54 = sbr.rel (0) target = $region17
    $region16: #{tpu_custom_call.1} parent=1 // pred_region
      %s56 = ssub.s32 256, 256
      %57 = vsyncadd [#allocation4], %s56
      %s58 = sshll.u32 [#allocation5], 4
      %s59 = int_to_ptr.vmem [resolvable:$true] %s58
      %64 = dma.vmem_to_hbm [thread:$0]  %s59, 256, %s2, [#allocation4], 128, 128, 8
    $region17: #{tpu_custom_call.1} parent=1 // pred_fallthru
      _
    // Predicated region
    $region18: #{tpu_custom_call.1} parent=1 // pred_check
      _
    $region19: #{tpu_custom_call.1} parent=1 // pred_check_branch
      %66 = sbr.rel (0) target = $region21
    $region20: #{tpu_custom_call.1} parent=1 // pred_region
      %67 = dma.done [#allocation4], 256
    $region21: #{tpu_custom_call.1} parent=1 // pred_fallthru
      _
    %68 = vsyncpa [#allocation3], 1
    %69 = vsyncpa [#allocation4], 1

</llo_original>
